<compile_context>
chip_gen: v5e
topology: v5e:2x2
jax: 0.10.0
libtpu: 0.0.40
codegen_flags: <defaults>
</compile_context>

<pallas_src>
import functools

import jax
import jax.numpy as jnp
from jax.experimental import pallas as pl
from jax.experimental.pallas import tpu as pltpu

LANE = 128


def _dice_kernel(p_ref, t_ref, loss_ref, acc_ref, *,
                 smooth, p_pow, hw, tile_rows, has_pad, n_chan):
    k = pl.program_id(1)

    @pl.when(k == 0)
    def _():
        acc_ref[0] = 0.0
        acc_ref[1] = 0.0

    if n_chan == 2:
        # softmax over 2 channels, channel 1  ==  sigmoid(l1 - l0)
        diff = (p_ref[0, 1].astype(jnp.float32)
                - p_ref[0, 0].astype(jnp.float32))                 # (TR, 128)
        prob1 = 1.0 / (1.0 + jnp.exp(-diff))
    else:
        # General C: softmax over the (leading) channel axis, take channel 1.
        logits = p_ref[0].astype(jnp.float32)                      # (C, TR, 128)
        m = jnp.max(logits, axis=0, keepdims=True)                 # leading-axis: VPU only
        e = jnp.exp(logits - m)
        prob1 = e[1] / jnp.sum(e, axis=0)                          # (TR, 128)

    t = t_ref[0].astype(jnp.float32)                               # (TR, 128), zero-padded

    if has_pad:
        # Mask out the zero-padding added in the wrapper (only traced if needed).
        row = jax.lax.broadcasted_iota(jnp.int32, prob1.shape, 0)
        lane = jax.lax.broadcasted_iota(jnp.int32, prob1.shape, 1)
        gidx = (k * tile_rows + row) * LANE + lane
        prob1 = jnp.where(gidx < hw, prob1, 0.0)
        # target was zero-padded; 0**p == 0, nothing to mask there.

    num_part = jnp.sum(prob1 * t)
    if p_pow == 2:
        den_part = jnp.sum(prob1 * prob1) + jnp.sum(t * t)
    else:
        den_part = jnp.sum(prob1 ** p_pow) + jnp.sum(t ** p_pow)

    acc_ref[0] = acc_ref[0] + num_part
    acc_ref[1] = acc_ref[1] + den_part

    @pl.when(k == pl.num_programs(1) - 1)
    def _():
        num = acc_ref[0] + smooth
        den = acc_ref[1] + smooth
        loss_ref[...] = jnp.full(loss_ref.shape, 1.0 - num / den, jnp.float32)


def binary_dice_loss(predict, target, smooth=1.0, p=2, reduction="mean"):
    """predict: [N, C, H, W] logits; target: [N, H, W].
    Matches BinaryDiceLoss.forward (softmax over C, take channel 1)."""
    N, C, H, W = predict.shape
    assert predict.shape[0] == target.shape[0], \
        "predict & target batch size don't match"
    assert target.shape == (N, H, W)
    assert C >= 2, "BinaryDiceLoss selects softmax channel 1; need C >= 2"
    HW = H * W

    R = pl.cdiv(HW, LANE)                   # rows of 128 lanes
    # Sublane rows per grid step: multiple of 8, capped so the double-buffered
    # input footprint stays small even under v7x's 64 MiB VMEM.
    TR = 8 * min(64, pl.cdiv(R, 8))         # 8 .. 512 rows (1K .. 64K elems / chan)
    K = pl.cdiv(R, TR)                      # HW-reduction grid extent
    R_pad = K * TR
    HW_pad = R_pad * LANE
    has_pad = HW_pad != HW

    # Keep native dtypes in HBM; the kernel casts in-vreg after the load.
    pf = predict.reshape(N, C, HW)
    tf = target.reshape(N, HW)
    if has_pad:
        pf = jnp.pad(pf, ((0, 0), (0, 0), (0, HW_pad - HW)))
        tf = jnp.pad(tf, ((0, 0), (0, HW_pad - HW)))
    pf = pf.reshape(N, C, R_pad, LANE)
    tf = tf.reshape(N, R_pad, LANE)

    kernel = functools.partial(
        _dice_kernel, smooth=float(smooth), p_pow=p, hw=HW,
        tile_rows=TR, has_pad=has_pad, n_chan=C)

    out = pl.pallas_call(
        kernel,
        out_shape=jax.ShapeDtypeStruct((N, 1, LANE), jnp.float32),
        grid=(N, K),
        in_specs=[
            pl.BlockSpec((1, C, TR, LANE), lambda b, k: (b, 0, k, 0)),
            pl.BlockSpec((1, TR, LANE), lambda b, k: (b, k, 0)),
        ],
        out_specs=pl.BlockSpec((1, 1, LANE), lambda b, k: (b, 0, 0)),
        scratch_shapes=[pltpu.SMEM((2,), jnp.float32)],
        compiler_params=pltpu.CompilerParams(
            dimension_semantics=("parallel", "arbitrary")),
    )(pf, tf)

    # Module's hard-coded scale (literal 256*256 in the PyTorch source,
    # independent of H and W).
    losses = out[:, 0, 0] * (256.0 * 256.0)

    if reduction == "mean":
        return jnp.mean(losses)
    elif reduction == "sum":
        return jnp.sum(losses)
    elif reduction == "none":
        return losses
    else:
        raise Exception("Unexpected reduction {}".format(reduction))


def _reference(predict, target, smooth=1.0, p=2, reduction="mean"):
    # Pure-JAX reference mirroring the PyTorch forward exactly.
    N = predict.shape[0]
    prob = jax.nn.softmax(predict.astype(jnp.float32), axis=1)[:, 1, :, :]
    pr = prob.reshape(N, -1)
    tg = target.astype(jnp.float32).reshape(N, -1)
    num = jnp.sum(pr * tg, axis=1) + smooth
    den = jnp.sum(pr ** p + tg ** p, axis=1) + smooth
    loss = 1.0 - num / den
    if reduction == "mean":
        return loss.mean() * 256 * 256
    elif reduction == "sum":
        return loss.sum() * 256 * 256
    return loss * 256 * 256


if __name__ == "__main__":
    key = jax.random.PRNGKey(0)
    k1, k2 = jax.random.split(key)

    N, C, H, W = 2, 2, 16, 16
    predict = jax.random.normal(k1, (N, C, H, W), dtype=jnp.float32)
    target = (jax.random.uniform(k2, (N, H, W)) > 0.5).astype(jnp.float32)

    out = binary_dice_loss(predict, target, smooth=1.0, p=2, reduction="mean")
    out = jax.block_until_ready(out)

    ref = _reference(predict, target, smooth=1.0, p=2, reduction="mean")
    assert jnp.allclose(out, ref, rtol=1e-4, atol=1e-2), (out, ref)

    print("KERNEL_OK")
</pallas_src>

<mosaic_0001>
module attributes {stable_mosaic.version = 11 : i64} {
  func.func @_dice_kernel(%arg0: i32, %arg1: i32, %arg2: memref<1x2x8x128xf32, #tpu.memory_space<vmem>>, %arg3: memref<1x8x128xf32, #tpu.memory_space<vmem>>, %arg4: memref<1x1x128xf32, #tpu.memory_space<vmem>>, %arg5: memref<2xf32, #tpu.memory_space<smem>>) attributes {dimension_semantics = [#tpu.dimension_semantics<parallel>, #tpu.dimension_semantics<arbitrary>], iteration_bounds = array<i64: 2, 1>, scalar_prefetch = 0 : i64, scratch_operands = 1 : i64, tpu.core_type = #tpu.core_type<tc>, window_params = [{transform_indices = @transform_0, window_bounds = array<i64: 1, 2, 8, 128>}, {transform_indices = @transform_1, window_bounds = array<i64: 1, 8, 128>}, {transform_indices = @transform_2, window_bounds = array<i64: 1, 1, 128>}]} {
    %c0_i32 = arith.constant 0 : i32
    %0 = arith.cmpi eq, %arg1, %c0_i32 : i32
    %1 = arith.extui %0 : i1 to i32
    %c0_i32_0 = arith.constant 0 : i32
    %2 = arith.cmpi ne, %1, %c0_i32_0 : i32
    scf.if %2 {
      %cst_22 = arith.constant 0.000000e+00 : f32
      %c0_23 = arith.constant 0 : index
      %54 = memref.load %arg5[%c0_23] : memref<2xf32, #tpu.memory_space<smem>>
      memref.store %cst_22, %arg5[%c0_23] : memref<2xf32, #tpu.memory_space<smem>>
      %cst_24 = arith.constant 0.000000e+00 : f32
      %c1_25 = arith.constant 1 : index
      %55 = memref.load %arg5[%c1_25] : memref<2xf32, #tpu.memory_space<smem>>
      memref.store %cst_24, %arg5[%c1_25] : memref<2xf32, #tpu.memory_space<smem>>
    } else {
    }
    %c0 = arith.constant 0 : index
    %c1 = arith.constant 1 : index
    %c0_1 = arith.constant 0 : index
    %c0_2 = arith.constant 0 : index
    %3 = vector.load %arg2[%c0, %c1, %c0_1, %c0_2] : memref<1x2x8x128xf32, #tpu.memory_space<vmem>>, vector<1x1x8x128xf32>
    %4 = vector.shape_cast %3 : vector<1x1x8x128xf32> to vector<8x128xf32>
    %c0_3 = arith.constant 0 : index
    %c0_4 = arith.constant 0 : index
    %c0_5 = arith.constant 0 : index
    %c0_6 = arith.constant 0 : index
    %5 = vector.load %arg2[%c0_3, %c0_4, %c0_5, %c0_6] : memref<1x2x8x128xf32, #tpu.memory_space<vmem>>, vector<1x1x8x128xf32>
    %6 = vector.shape_cast %5 : vector<1x1x8x128xf32> to vector<8x128xf32>
    %7 = arith.subf %4, %6 : vector<8x128xf32>
    %cst = arith.constant 0.000000e+00 : f32
    %8 = vector.broadcast %cst : f32 to vector<8x128xf32>
    %9 = arith.subf %8, %7 : vector<8x128xf32>
    %10 = math.exp %9 : vector<8x128xf32>
    %cst_7 = arith.constant 1.000000e+00 : f32
    %11 = vector.broadcast %cst_7 : f32 to vector<8x128xf32>
    %12 = arith.addf %11, %10 : vector<8x128xf32>
    %cst_8 = arith.constant 1.000000e+00 : f32
    %13 = vector.broadcast %cst_8 : f32 to vector<8x128xf32>
    %14 = arith.divf %13, %12 : vector<8x128xf32>
    %c0_9 = arith.constant 0 : index
    %c0_10 = arith.constant 0 : index
    %c0_11 = arith.constant 0 : index
    %15 = vector.load %arg3[%c0_9, %c0_10, %c0_11] : memref<1x8x128xf32, #tpu.memory_space<vmem>>, vector<1x8x128xf32>
    %16 = vector.shape_cast %15 : vector<1x8x128xf32> to vector<8x128xf32>
    %17 = tpu.iota {dimensions = array<i32: 0>} : vector<8x128xi32>
    %18 = tpu.iota {dimensions = array<i32: 1>} : vector<8x128xi32>
    %c8_i32 = arith.constant 8 : i32
    %19 = arith.muli %arg1, %c8_i32 : i32
    %20 = vector.broadcast %19 : i32 to vector<8x128xi32>
    %21 = arith.addi %20, %17 : vector<8x128xi32>
    %c128_i32 = arith.constant 128 : i32
    %22 = vector.broadcast %c128_i32 : i32 to vector<8x128xi32>
    %23 = arith.muli %21, %22 : vector<8x128xi32>
    %24 = arith.addi %23, %18 : vector<8x128xi32>
    %c256_i32 = arith.constant 256 : i32
    %25 = vector.broadcast %c256_i32 : i32 to vector<8x128xi32>
    %26 = arith.cmpi slt, %24, %25 : vector<8x128xi32>
    %cst_12 = arith.constant 0.000000e+00 : f32
    %27 = vector.broadcast %cst_12 : f32 to vector<8x128xf32>
    %28 = arith.select %26, %14, %27 : vector<8x128xi1>, vector<8x128xf32>
    %29 = arith.mulf %28, %16 : vector<8x128xf32>
    %30 = vector.shape_cast %29 : vector<8x128xf32> to vector<1x8x128xf32>
    %cst_13 = arith.constant dense<0.000000e+00> : vector<1xf32>
    %31 = vector.multi_reduction <add>, %30, %cst_13 [1, 2] : vector<1x8x128xf32> to vector<1xf32>
    %32 = vector.shape_cast %31 : vector<1xf32> to vector<1x1x1xf32>
    %33 = vector.extract %32[0, 0, 0] : f32 from vector<1x1x1xf32>
    %34 = arith.mulf %28, %28 : vector<8x128xf32>
    %35 = vector.shape_cast %34 : vector<8x128xf32> to vector<1x8x128xf32>
    %cst_14 = arith.constant dense<0.000000e+00> : vector<1xf32>
    %36 = vector.multi_reduction <add>, %35, %cst_14 [1, 2] : vector<1x8x128xf32> to vector<1xf32>
    %37 = vector.shape_cast %36 : vector<1xf32> to vector<1x1x1xf32>
    %38 = vector.extract %37[0, 0, 0] : f32 from vector<1x1x1xf32>
    %39 = arith.mulf %16, %16 : vector<8x128xf32>
    %40 = vector.shape_cast %39 : vector<8x128xf32> to vector<1x8x128xf32>
    %cst_15 = arith.constant dense<0.000000e+00> : vector<1xf32>
    %41 = vector.multi_reduction <add>, %40, %cst_15 [1, 2] : vector<1x8x128xf32> to vector<1xf32>
    %42 = vector.shape_cast %41 : vector<1xf32> to vector<1x1x1xf32>
    %43 = vector.extract %42[0, 0, 0] : f32 from vector<1x1x1xf32>
    %44 = arith.addf %38, %43 : f32
    %c0_16 = arith.constant 0 : index
    %45 = memref.load %arg5[%c0_16] : memref<2xf32, #tpu.memory_space<smem>>
    %46 = arith.addf %45, %33 : f32
    %c0_17 = arith.constant 0 : index
    %47 = memref.load %arg5[%c0_17] : memref<2xf32, #tpu.memory_space<smem>>
    memref.store %46, %arg5[%c0_17] : memref<2xf32, #tpu.memory_space<smem>>
    %c1_18 = arith.constant 1 : index
    %48 = memref.load %arg5[%c1_18] : memref<2xf32, #tpu.memory_space<smem>>
    %49 = arith.addf %48, %44 : f32
    %c1_19 = arith.constant 1 : index
    %50 = memref.load %arg5[%c1_19] : memref<2xf32, #tpu.memory_space<smem>>
    memref.store %49, %arg5[%c1_19] : memref<2xf32, #tpu.memory_space<smem>>
    %c0_i32_20 = arith.constant 0 : i32
    %51 = arith.cmpi eq, %arg1, %c0_i32_20 : i32
    %52 = arith.extui %51 : i1 to i32
    %c0_i32_21 = arith.constant 0 : i32
    %53 = arith.cmpi ne, %52, %c0_i32_21 : i32
    scf.if %53 {
      %c0_22 = arith.constant 0 : index
      %54 = memref.load %arg5[%c0_22] : memref<2xf32, #tpu.memory_space<smem>>
      %cst_23 = arith.constant 1.000000e+00 : f32
      %55 = arith.addf %54, %cst_23 : f32
      %c1_24 = arith.constant 1 : index
      %56 = memref.load %arg5[%c1_24] : memref<2xf32, #tpu.memory_space<smem>>
      %cst_25 = arith.constant 1.000000e+00 : f32
      %57 = arith.addf %56, %cst_25 : f32
      %58 = arith.divf %55, %57 : f32
      %cst_26 = arith.constant 1.000000e+00 : f32
      %59 = arith.subf %cst_26, %58 : f32
      %60 = vector.broadcast %59 : f32 to vector<1x1x128xf32>
      %c0_27 = arith.constant 0 : index
      %c0_28 = arith.constant 0 : index
      %c0_29 = arith.constant 0 : index
      %61 = vector.load %arg4[%c0_27, %c0_28, %c0_29] : memref<1x1x128xf32, #tpu.memory_space<vmem>>, vector<1x1x128xf32>
      tpu.vector_store %arg4[%c0_27, %c0_28, %c0_29], %60 {strides = array<i32>} : memref<1x1x128xf32, #tpu.memory_space<vmem>>, vector<1x1x128xf32>,
    } else {
    }
    return
  }
  func.func @transform_0(%arg0: i32, %arg1: i32) -> (i32, i32, i32, i32) {
    %c0_i32 = arith.constant 0 : i32
    %c0_i32_0 = arith.constant 0 : i32
    %c0_i32_1 = arith.constant 0 : i32
    return %arg0, %c0_i32, %arg1, %c0_i32_0 : i32, i32, i32, i32
  }
  func.func @transform_1(%arg0: i32, %arg1: i32) -> (i32, i32, i32) {
    %c0_i32 = arith.constant 0 : i32
    %c0_i32_0 = arith.constant 0 : i32
    return %arg0, %arg1, %c0_i32 : i32, i32, i32
  }
  func.func @transform_2(%arg0: i32, %arg1: i32) -> (i32, i32, i32) {
    %c0_i32 = arith.constant 0 : i32
    %c0_i32_0 = arith.constant 0 : i32
    %c0_i32_1 = arith.constant 0 : i32
    return %arg0, %c0_i32, %c0_i32_0 : i32, i32, i32
  }
}

</mosaic_0001>

<llo_original>
// kernel: tpu_custom_call.1
$region0: #{tpu_custom_call.1}
  #allocation0 [shape = 'u32[]', space=smem, size = 0x4, offset = 0x4, fixed_abs, tag = 'smem constant byte address 0x4 - core index']
  #allocation1 [shape = 'u32[72,128]{1,0:T(1,128)}', space=vmem, size = 0x9000, scoped, tag = 'internal scratch']
  #allocation2 [shape = 'f32[2]{0:T(128)}', space=smem, size = 0x200, scoped, tag = 'scratch operand']
  %s0 = inlined_call_operand.hbm [shape: f32[2,2,8,128], index: 0, kind: input, shape index: {}]
  %s1 = inlined_call_operand.hbm [shape: f32[2,8,128], index: 1, kind: input, shape index: {}]
  %s2 = inlined_call_operand.hbm [shape: f32[2,1,128], index: 2, kind: output, shape index: {}]
  %s3 = sld [smem:[#allocation0]]
  $region57: #{tpu_custom_call.1} parent=0
    _
  %s5 = ssub.s32 1, %s3
  %s6 = scalar_select 0, %s5, %s3
  $region1: #{tpu_custom_call.1} parent=0
    #allocation3 [shape = 'u8[16384]{0}', space=vmem, size = 0x4000, scoped, tag = 'input window, operand 0']
    #allocation4 [shape = 's32[2]{0}', space=sflag, size = 0x8, scoped, tag = 'scoped memory for tpu_custom_call.1']
    #allocation5 [shape = 's32[2]{0}', space=sflag, size = 0x8, scoped, tag = 'scoped memory for tpu_custom_call.1']
    #allocation6 [shape = 'u8[8192]{0}', space=vmem, size = 0x2000, scoped, tag = 'input window, operand 1']
    #allocation7 [shape = 's32[2]{0}', space=sflag, size = 0x8, scoped, tag = 'scoped memory for tpu_custom_call.1']
    #allocation8 [shape = 'u8[1024]{0}', space=vmem, size = 0x400, scoped, tag = 'output window, operand 0']
    %7 = vsyncpa [#allocation4], 0
    %s8 = scalar_lea.sflag [#allocation4], 1
    %9 = vsyncpa %s8, 0
    %10 = vsyncpa [#allocation7], 0
    %s11 = scalar_lea.sflag [#allocation7], 1
    %12 = vsyncpa %s11, 0
    %13 = vsyncpa [#allocation5], 0
    %s14 = scalar_lea.sflag [#allocation5], 1
    %15 = vsyncpa %s14, 0
    loop: start=0, step=1, limit=4
    $region2: #{tpu_custom_call.1} parent=1 // loop_pre_header
      _
    $region3: #{tpu_custom_call.1} parent=1 // loop_header
      %s17 = sphi 0, %s21
      %p18 = scmp.ge.s32.totalorder %s17, 4
      %s24 = sphi 0, %s36
      %s25 = sphi 0, %s32
      %s26 = sphi 0, %s24
      %s27 = sphi 0, %s25
      %s28 = sphi 0, %s26
      %s29 = sphi 0, %s27
      %s41 = sphi 0, %s43
      %s44 = sphi 0, %s41
      %s45 = sphi 0, %s44
      %s61 = sphi 0, %s45
      %s69 = sphi 0, %s71
      %s72 = sphi 0, %s69
      %s73 = sphi 0, %s72
      %s89 = sphi 0, %s73
      %s95 = sphi 0, %s97
      %s98 = sphi 0, %s95
      %s99 = sphi 0, %s98
      %s115 = sphi 0, %s99
    $region4: #{tpu_custom_call.1} parent=1 // loop_header_branch
      %20 = sbr.rel (%p18) target = $region8
    $region5: #{tpu_custom_call.1} parent=1 // loop_body
      %s22 = ssub.s32 %s17, 1
      %s23 = ssub.s32 %s17, 2
      %s30 = sadd.s32 1, %s25
      %p31 = scmp.ge.s32.totalorder %s30, 1
      %s32 = scalar_select %p31, 0, %s30
      %s33 = sadd.s32 1, %s24
      %s34 = scalar_select %p31, %s33, %s24
      %p35 = scmp.ge.s32.totalorder %s34, 2
      %s36 = scalar_select %p35, 0, %s34
      %s37 = ssub.s32 %s24, %s36
      %s38 = ssub.s32 %s25, %s32
      %s39 = sor.u32 %s37, %s38
      %p40 = scmp.eq.s32.totalorder %s39, 0
      %s42 = sadd.s32 %s41, 1
      %s43 = scalar_select %p40, %s41, %s42
      %p46 = pneg %p40
      %p47 = scmp.eq.s32.totalorder %s17, 1
      %p48 = por %p46, %p47
      %p49 = scmp.ne.s32.totalorder %s41, %s44
      %p50 = scmp.eq.s32.totalorder %s17, 0
      %p51 = por %p49, %p50
      %p52 = scmp.ne.s32.totalorder %s41, %s44
      %p53 = scmp.eq.s32.totalorder %s22, 1
      %p54 = por %p52, %p53
      %p55 = scmp.ne.s32.totalorder %s44, %s45
      %p56 = scmp.eq.s32.totalorder %s22, 0
      %p57 = por %p55, %p56
      %p58 = scmp.ne.s32.totalorder %s44, %s45
      %p59 = scmp.eq.s32.totalorder %s23, 1
      %p60 = por %p58, %p59
      %p62 = scmp.ne.s32.totalorder %s45, %s61
      %p63 = scmp.eq.s32.totalorder %s23, 0
      %p64 = por %p62, %p63
      %s65 = ssub.s32 %s24, %s36
      %s66 = ssub.s32 %s25, %s32
      %s67 = sor.u32 %s65, %s66
      %p68 = scmp.eq.s32.totalorder %s67, 0
      %s70 = sadd.s32 %s69, 1
      %s71 = scalar_select %p68, %s69, %s70
      %p74 = pneg %p68
      %p75 = scmp.eq.s32.totalorder %s17, 1
      %p76 = por %p74, %p75
      %p77 = scmp.ne.s32.totalorder %s69, %s72
      %p78 = scmp.eq.s32.totalorder %s17, 0
      %p79 = por %p77, %p78
      %p80 = scmp.ne.s32.totalorder %s69, %s72
      %p81 = scmp.eq.s32.totalorder %s22, 1
      %p82 = por %p80, %p81
      %p83 = scmp.ne.s32.totalorder %s72, %s73
      %p84 = scmp.eq.s32.totalorder %s22, 0
      %p85 = por %p83, %p84
      %p86 = scmp.ne.s32.totalorder %s72, %s73
      %p87 = scmp.eq.s32.totalorder %s23, 1
      %p88 = por %p86, %p87
      %p90 = scmp.ne.s32.totalorder %s73, %s89
      %p91 = scmp.eq.s32.totalorder %s23, 0
      %p92 = por %p90, %p91
      %s93 = ssub.s32 %s24, %s36
      %p94 = scmp.eq.s32.totalorder %s93, 0
      %s96 = sadd.s32 %s95, 1
      %s97 = scalar_select %p94, %s95, %s96
      %p100 = pneg %p94
      %p101 = scmp.eq.s32.totalorder %s17, 1
      %p102 = por %p100, %p101
      %p103 = scmp.ne.s32.totalorder %s95, %s98
      %p104 = scmp.eq.s32.totalorder %s17, 0
      %p105 = por %p103, %p104
      %p106 = scmp.ne.s32.totalorder %s95, %s98
      %p107 = scmp.eq.s32.totalorder %s22, 1
      %p108 = por %p106, %p107
      %p109 = scmp.ne.s32.totalorder %s98, %s99
      %p110 = scmp.eq.s32.totalorder %s22, 0
      %p111 = por %p109, %p110
      %p112 = scmp.ne.s32.totalorder %s98, %s99
      %p113 = scmp.eq.s32.totalorder %s23, 1
      %p114 = por %p112, %p113
      %p116 = scmp.ne.s32.totalorder %s99, %s115
      %p117 = scmp.eq.s32.totalorder %s23, 0
      %p118 = por %p116, %p117
      %p119 = scmp.le.s32.totalorder 1, %s17
      %p120 = scmp.lt.s32.totalorder %s17, 3
      %p121 = pnand %p119, %p120
      %p122 = pneg %p121
      // Predicated region
      $region9: #{tpu_custom_call.1} parent=5 // pred_check
        _
      $region10: #{tpu_custom_call.1} parent=5 // pred_check_branch
        %124 = sbr.rel (%p121) target = $region12
      $region11: #{tpu_custom_call.1} parent=5 // pred_region
        %s125 = ssub.s32 %s17, 1
      $region12: #{tpu_custom_call.1} parent=5 // pred_fallthru
        _
      %p126 = scmp.lt.s32.totalorder %s17, 2
      // Predicated region
      $region13: #{tpu_custom_call.1} parent=5 // pred_check
        %p127 = pneg %p126
      $region14: #{tpu_custom_call.1} parent=5 // pred_check_branch
        %129 = sbr.rel (%p127) target = $region16
      $region15: #{tpu_custom_call.1} parent=5 // pred_region
        // Predicated region
        $region17: #{tpu_custom_call.1} parent=15 // pred_check
          %p130 = pneg %p51
        $region18: #{tpu_custom_call.1} parent=15 // pred_check_branch
          %132 = sbr.rel (%p130) target = $region20
        $region19: #{tpu_custom_call.1} parent=15 // pred_region
          %s133 = sand.u32 %s41, 1
          %s134 = scalar_lea.sflag [#allocation4], %s133
          %s135 = sand.u32 %s41, 1
          %s136 = smul.addr %s135, 16
          %s137 = scalar_lea.vmem [#allocation3], %s136
          %139 = vsyncadd %s134, 0
          %s140 = smul.addr %s24, 2
          %s141 = sadd.s32 %s25, %s140
          %s142 = smul.addr %s141, 8
          %s143 = scalar_lea.hbm %s0, %s142
          %s144 = sshll.u32 %s143, 4
          %s145 = int_to_ptr.hbm [resolvable:$true] %s144
          %s146 = sshll.u32 %s137, 4
          %s147 = int_to_ptr.vmem [resolvable:$true] %s146
          %152 = dma.hbm_to_vmem [thread:$0]  %s145, 256, %s147, %s134, 128, 128, 8
        $region20: #{tpu_custom_call.1} parent=15 // pred_fallthru
          _
        // Predicated region
        $region21: #{tpu_custom_call.1} parent=15 // pred_check
          %p153 = pneg %p79
        $region22: #{tpu_custom_call.1} parent=15 // pred_check_branch
          %155 = sbr.rel (%p153) target = $region24
        $region23: #{tpu_custom_call.1} parent=15 // pred_region
          %s156 = sand.u32 %s69, 1
          %s157 = scalar_lea.sflag [#allocation7], %s156
          %s158 = sand.u32 %s69, 1
          %s159 = smul.addr %s158, 8
          %s160 = scalar_lea.vmem [#allocation6], %s159
          %162 = vsyncadd %s157, 0
          %s163 = sadd.s32 %s25, %s24
          %s164 = smul.addr %s163, 8
          %s165 = scalar_lea.hbm %s1, %s164
          %s167 = sshll.u32 %s165, 4
          %s168 = int_to_ptr.hbm [resolvable:$true] %s167
          %s169 = sshll.u32 %s160, 4
          %s170 = int_to_ptr.vmem [resolvable:$true] %s169
          %172 = dma.hbm_to_vmem [thread:$0]  %s168, 128, %s170, %s157
        $region24: #{tpu_custom_call.1} parent=15 // pred_fallthru
          _
      $region16: #{tpu_custom_call.1} parent=5 // pred_fallthru
        _
      %p173 = scmp.le.s32.totalorder 1, %s17
      %p174 = scmp.lt.s32.totalorder %s17, 3
      %p175 = pnand %p173, %p174
      %p176 = pneg %p175
      // Predicated region
      $region25: #{tpu_custom_call.1} parent=5 // pred_check
        _
      $region26: #{tpu_custom_call.1} parent=5 // pred_check_branch
        %178 = sbr.rel (%p175) target = $region28
      $region27: #{tpu_custom_call.1} parent=5 // pred_region
        %s179 = ssub.s32 %s17, 1
        %s180 = sand.u32 %s44, 1
        %s181 = scalar_lea.sflag [#allocation4], %s180
        %s182 = sand.u32 %s44, 1
        %s183 = smul.addr %s182, 16
        %s184 = scalar_lea.vmem [#allocation3], %s183
        // Predicated region
        $region29: #{tpu_custom_call.1} parent=27 // pred_check
          %p185 = pneg %p57
        $region30: #{tpu_custom_call.1} parent=27 // pred_check_branch
          %187 = sbr.rel (%p185) target = $region32
        $region31: #{tpu_custom_call.1} parent=27 // pred_region
          %189 = dma.done %s181, 256
        $region32: #{tpu_custom_call.1} parent=27 // pred_fallthru
          _
        %s190 = sand.u32 %s72, 1
        %s191 = scalar_lea.sflag [#allocation7], %s190
        %s192 = sand.u32 %s72, 1
        %s193 = smul.addr %s192, 8
        %s194 = scalar_lea.vmem [#allocation6], %s193
        // Predicated region
        $region33: #{tpu_custom_call.1} parent=27 // pred_check
          %p195 = pneg %p85
        $region34: #{tpu_custom_call.1} parent=27 // pred_check_branch
          %197 = sbr.rel (%p195) target = $region36
        $region35: #{tpu_custom_call.1} parent=27 // pred_region
          %199 = dma.done %s191, 128
        $region36: #{tpu_custom_call.1} parent=27 // pred_fallthru
          _
        %s200 = sand.u32 %s44, 1
        %s201 = scalar_lea.sflag [#allocation4], %s200
        %s202 = sand.u32 %s44, 1
        %s203 = smul.addr %s202, 16
        %s204 = scalar_lea.vmem [#allocation3], %s203
        %p205 = pneg %p57
        %p206 = pneg %p54
        %s207 = sand.u32 %s72, 1
        %s208 = scalar_lea.sflag [#allocation7], %s207
        %s209 = sand.u32 %s72, 1
        %s210 = smul.addr %s209, 8
        %s211 = scalar_lea.vmem [#allocation6], %s210
        %p212 = pneg %p85
        %p213 = pneg %p82
        %p214 = pneg %p111
        %p215 = pneg %p108
        %s216 = sand.u32 %s98, 1
        %s217 = scalar_lea.sflag [#allocation5], %s216
        %s218 = sand.u32 %s98, 1
        %s219 = scalar_lea.vmem [#allocation8], %s218
        %p220 = scmp.eq.s32.totalorder %s27, 0
        // Predicated region
        $region37: #{tpu_custom_call.1} parent=27 // pred_check
          %p221 = pneg %p220
        $region38: #{tpu_custom_call.1} parent=27 // pred_check_branch
          %223 = sbr.rel (%p221) target = $region40
        $region39: #{tpu_custom_call.1} parent=27 // pred_region
          %s224 = scalar_lea.smem [#allocation2], 0
          %225 = sst [smem:[%s224]] 0.0
          %s226 = scalar_lea.smem [#allocation2], 1
          %227 = sst [smem:[%s226]] 0.0
        $region40: #{tpu_custom_call.1} parent=27 // pred_fallthru
          _
        %s228 = scalar_lea.vmem %s184, 8 [#allocation3]
        %v229 = vld [vmem:[%s228] sm:$0xff]
        %v230 = vld [vmem:[%s184] sm:$0xff]
        %v231 = vsub.f32 %v229, %v230
        %v232 = vsub.f32 0.0, %v231
        %v233 = vmul.f32 %v232, 1.442695
        %v234 = vpow.pop %v233
        %v235 = vadd.f32 %v234, 1.0
        %v236 = vrcp.pop %v235
        %v237 = vmul.f32 %v235, %v236
        %v238 = vsub.f32 1.0, %v237
        %v239 = vmul.f32 %v236, %v238
        %v240 = vadd.f32 %v236, %v239
        %vm241 = vweird.f32 %v235
        %vm242 = vweird.f32 %v236
        %vm243 = vmor %vm241, %vm242
        %v244 = vsel %vm243, %v236, %v240
        %v245 = vand.u32 2147483647, %v235
        %vm246 = vcmp.eq.f32.partialorder %v245, 8.507059e+37
        %v247 = vand.u32 %v235, 2147483648
        %v248 = vor.u32 1.1754944e-38, %v247
        %v249 = vsel %vm246, %v248, %v244
        %v250 = vmul.f32 1.0, %v249
        %v251 = vld [vmem:[%s194] sm:$0xff]
        %v252 = vlaneseq
        %v253 = vshrl.u32 %v252, 7
        %v254 = vlaneseq
        %v255 = vand.u32 %v254, 127
        %s256 = smul.u32 %s27, 8
        %v257 = vstv %s256
        %v258 = vadd.s32 %v257, %v253
        %v259 = vmul.u32 %v258, 128
        %v260 = vadd.s32 %v259, %v255
        %vm261 = vcmp.lt.s32.totalorder %v260, 256
        %v262 = vsel %vm261, %v250, 0.0
        %v263 = vmul.f32 %v262, %v251
        %264 = vadd.xlane.f32.xlu0 %v263
        %v265 = vpop.xlane.xlu0 %264
        %v266 = vrot.slane %v265, 4
        %v267 = vadd.f32 %v265, %v266
        %v268 = vrot.slane %v267, 2
        %v269 = vadd.f32 %v267, %v268
        %v270 = vrot.slane %v269, 1
        %v271 = vadd.f32 %v269, %v270
        %s272 = vtos %v271
        %v273 = vmul.f32 %v262, %v262
        %274 = vadd.xlane.f32.xlu0 %v273
        %v275 = vpop.xlane.xlu0 %274
        %v276 = vrot.slane %v275, 4
        %v277 = vadd.f32 %v275, %v276
        %v278 = vrot.slane %v277, 2
        %v279 = vadd.f32 %v277, %v278
        %v280 = vrot.slane %v279, 1
        %v281 = vadd.f32 %v279, %v280
        %s282 = vtos %v281
        %v283 = vmul.f32 %v251, %v251
        %284 = vadd.xlane.f32.xlu0 %v283
        %v285 = vpop.xlane.xlu0 %284
        %v286 = vrot.slane %v285, 4
        %v287 = vadd.f32 %v285, %v286
        %v288 = vrot.slane %v287, 2
        %v289 = vadd.f32 %v287, %v288
        %v290 = vrot.slane %v289, 1
        %v291 = vadd.f32 %v289, %v290
        %s292 = vtos %v291
        %s293 = sadd.f32 %s282, %s292
        %s294 = sld [smem:[#allocation2]]
        %s295 = sadd.f32 %s294, %s272
        %s296 = scalar_lea.smem [#allocation2], 0
        %297 = sst [smem:[%s296]] %s295
        %s298 = sld [smem:[#allocation2 + $0x1]]
        %s299 = sadd.f32 %s298, %s293
        %s300 = scalar_lea.smem [#allocation2], 1
        %301 = sst [smem:[%s300]] %s299
        // Predicated region
        $region41: #{tpu_custom_call.1} parent=27 // pred_check
          %p302 = pneg %p220
        $region42: #{tpu_custom_call.1} parent=27 // pred_check_branch
          %304 = sbr.rel (%p302) target = $region44
        $region43: #{tpu_custom_call.1} parent=27 // pred_region
          %s305 = sld [smem:[#allocation2]]
          %s306 = sadd.f32 %s305, 1.0
          %s307 = sld [smem:[#allocation2 + $0x1]]
          %s308 = sadd.f32 %s307, 1.0
          %v309 = vstv %s308
          %v310 = vrcp.pop %v309
          %v311 = vmul.f32 %v309, %v310
          %v312 = vsub.f32 1.0, %v311
          %v313 = vmul.f32 %v310, %v312
          %v314 = vadd.f32 %v310, %v313
          %vm315 = vweird.f32 %v309
          %vm316 = vweird.f32 %v310
          %vm317 = vmor %vm315, %vm316
          %v318 = vsel %vm317, %v310, %v314
          %v319 = vand.u32 2147483647, %v309
          %vm320 = vcmp.eq.f32.partialorder %v319, 8.507059e+37
          %v321 = vand.u32 %v309, 2147483648
          %v322 = vor.u32 1.1754944e-38, %v321
          %v323 = vsel %vm320, %v322, %v318
          %s324 = vtos %v323
          %s325 = smul.f32 %s306, %s324
          %s326 = ssub.f32 1.0, %s325
          %v327 = vstv %s326
          %328 = vst [vmem:[%s219] sm:$0x1] %v327
        $region44: #{tpu_custom_call.1} parent=27 // pred_fallthru
          _
        %s329 = sand.u32 %s98, 1
        %s330 = scalar_lea.sflag [#allocation5], %s329
        %s331 = sand.u32 %s98, 1
        %s332 = scalar_lea.vmem [#allocation8], %s331
        // Predicated region
        $region45: #{tpu_custom_call.1} parent=27 // pred_check
          %p333 = pneg %p108
        $region46: #{tpu_custom_call.1} parent=27 // pred_check_branch
          %335 = sbr.rel (%p333) target = $region48
        $region47: #{tpu_custom_call.1} parent=27 // pred_region
          %337 = vsyncadd %s330, 0
          %s338 = scalar_lea.hbm %s2, %s26
          %s340 = sshll.u32 %s332, 4
          %s341 = int_to_ptr.vmem [resolvable:$true] %s340
          %s342 = sshll.u32 %s338, 4
          %s343 = int_to_ptr.hbm [resolvable:$true] %s342
          %345 = dma.vmem_to_hbm [thread:$0]  %s341, 16, %s343, %s330
        $region48: #{tpu_custom_call.1} parent=27 // pred_fallthru
          _
      $region28: #{tpu_custom_call.1} parent=5 // pred_fallthru
        _
      %p346 = scmp.le.s32.totalorder 2, %s17
      // Predicated region
      $region49: #{tpu_custom_call.1} parent=5 // pred_check
        %p347 = pneg %p346
      $region50: #{tpu_custom_call.1} parent=5 // pred_check_branch
        %349 = sbr.rel (%p347) target = $region52
      $region51: #{tpu_custom_call.1} parent=5 // pred_region
        %s350 = ssub.s32 %s17, 2
        // Predicated region
        $region53: #{tpu_custom_call.1} parent=51 // pred_check
          %p351 = pneg %p114
        $region54: #{tpu_custom_call.1} parent=51 // pred_check_branch
          %353 = sbr.rel (%p351) target = $region56
        $region55: #{tpu_custom_call.1} parent=51 // pred_region
          %s354 = sand.u32 %s99, 1
          %s355 = scalar_lea.sflag [#allocation5], %s354
          %s356 = sand.u32 %s99, 1
          %s357 = scalar_lea.vmem [#allocation8], %s356
          %359 = dma.done %s355, 16
        $region56: #{tpu_custom_call.1} parent=51 // pred_fallthru
          _
      $region52: #{tpu_custom_call.1} parent=5 // pred_fallthru
        _
    $region6: #{tpu_custom_call.1} parent=1 // loop_footer
      %s21 = sadd.s32 1, %s17
    $region7: #{tpu_custom_call.1} parent=1 // loop_footer_branch
      %16 = sbr.rel target = $region3
    $region8: #{tpu_custom_call.1} parent=1 // loop_exit
      _
    %360 = vsyncpa [#allocation4], 1
    %s361 = scalar_lea.sflag [#allocation4], 1
    %362 = vsyncpa %s361, 1
    %363 = vsyncpa [#allocation7], 1
    %s364 = scalar_lea.sflag [#allocation7], 1
    %365 = vsyncpa %s364, 1
    %366 = vsyncpa [#allocation5], 1
    %s367 = scalar_lea.sflag [#allocation5], 1
    %368 = vsyncpa %s367, 1

</llo_original>
